<compile_context>
chip_gen: v5e
topology: v5e:2x2
jax: 0.10.0
libtpu: 0.0.40
codegen_flags: <defaults>
</compile_context>

<pallas_src>
import jax
import jax.numpy as jnp
from jax.experimental import pallas as pl
from jax.experimental.pallas import tpu as pltpu

CATEGORY_SIZE = 128      # the hard-coded "+128" in the module's Linear in_features
LANE = 128
SUBLANE = 8
NEG_INF = -1e30          # finite "minus infinity" for padded output lanes


def _round_up(x, m):
    return (x + m - 1) // m * m


# ---------------------------------------------------------------------------
# Kernel: one grid step == one RNN time step. Weights resident, hidden carried
# in VMEM scratch.
# ---------------------------------------------------------------------------
def _rnn_seq_kernel(cat_ref, x_ref, h0_ref,
                    w1_ref, b1_ref, w2_ref, b2_ref,
                    out_ref, hid_out_ref, h_scratch):
    t = pl.program_id(0)
    i_pad = x_ref.shape[2]       # padded input feature width (static)
    h_pad = h0_ref.shape[1]      # padded hidden width (static)

    @pl.when(t == 0)
    def _():
        h_scratch[...] = h0_ref[...]

    cat = cat_ref[...]           # (B_pad, 128)
    x = x_ref[0]                 # (B_pad, I_pad)
    h = h_scratch[...]           # (B_pad, H_pad)

    # Fused i2h|i2o linear, input concat replaced by three row-sliced dots.
    # Result layout: [:, :H_pad] = new hidden, [:, H_pad:] = i2o output,
    # i.e. it is already cat((hidden', output), dim=1) for the o2o stage.
    ho = (jnp.dot(cat, w1_ref[:CATEGORY_SIZE, :],
                  preferred_element_type=jnp.float32)
          + jnp.dot(x, w1_ref[CATEGORY_SIZE:CATEGORY_SIZE + i_pad, :],
                    preferred_element_type=jnp.float32)
          + jnp.dot(h, w1_ref[CATEGORY_SIZE + i_pad:, :],
                    preferred_element_type=jnp.float32)
          + b1_ref[...])

    new_h = ho[:, :h_pad]

    # o2o linear directly on the fused stage-1 result.
    logits = jnp.dot(ho, w2_ref[...],
                     preferred_element_type=jnp.float32) + b2_ref[...]

    # dropout(p=0.1): identity in eval/testing mode.
    # TODO(synk): training-mode dropout (random mask + 1/(1-p) scale) not implemented.

    # Numerically stable log_softmax over the feature (lane) axis. Padded lanes
    # carry a -1e30 bias, so they never win the max and exp() to exactly 0.
    m = jnp.max(logits, axis=1, keepdims=True)
    shifted = logits - m
    lse = jnp.log(jnp.sum(jnp.exp(shifted), axis=1, keepdims=True))
    out_ref[0] = shifted - lse

    h_scratch[...] = new_h
    hid_out_ref[...] = new_h     # constant index_map -> written back once at end


# ---------------------------------------------------------------------------
# Parameter packing: fuse + pad weights in the wrapper (pure JAX, outside the
# kernel), keeping the unpadded params as the source of truth.
# ---------------------------------------------------------------------------
def _pack_padded_params(params, input_size, hidden_size, output_size,
                        i_pad, h_pad, o_pad):
    w_i2h, b_i2h = params["w_i2h"], params["b_i2h"]
    w_i2o, b_i2o = params["w_i2o"], params["b_i2o"]
    w_o2o, b_o2o = params["w_o2o"], params["b_o2o"]

    com_rows = CATEGORY_SIZE + i_pad + h_pad
    w1 = jnp.zeros((com_rows, h_pad + o_pad), jnp.float32)

    def place_rows(dst, src, col_off, ncols):
        # src rows are [category | input | hidden] tightly packed.
        dst = dst.at[:CATEGORY_SIZE, col_off:col_off + ncols].set(
            src[:CATEGORY_SIZE])
        dst = dst.at[CATEGORY_SIZE:CATEGORY_SIZE + input_size,
                     col_off:col_off + ncols].set(
            src[CATEGORY_SIZE:CATEGORY_SIZE + input_size])
        dst = dst.at[CATEGORY_SIZE + i_pad:CATEGORY_SIZE + i_pad + hidden_size,
                     col_off:col_off + ncols].set(
            src[CATEGORY_SIZE + input_size:])
        return dst

    w1 = place_rows(w1, w_i2h, 0, hidden_size)
    w1 = place_rows(w1, w_i2o, h_pad, output_size)

    b1 = jnp.zeros((1, h_pad + o_pad), jnp.float32)
    b1 = b1.at[:, :hidden_size].set(b_i2h)
    b1 = b1.at[:, h_pad:h_pad + output_size].set(b_i2o)

    w2 = jnp.zeros((h_pad + o_pad, o_pad), jnp.float32)
    w2 = w2.at[:hidden_size, :output_size].set(w_o2o[:hidden_size])
    w2 = w2.at[h_pad:h_pad + output_size, :output_size].set(w_o2o[hidden_size:])

    # Padded output columns get a huge negative bias: excluded from max and
    # contribute exp(.) == 0 to the log_softmax normalizer.
    b2 = jnp.full((1, o_pad), NEG_INF, jnp.float32)
    b2 = b2.at[:, :output_size].set(b_o2o)

    return w1, b1, w2, b2


# ---------------------------------------------------------------------------
# Wrapper: one pallas_call for the whole sequence.
# ---------------------------------------------------------------------------
def rnn_forward(category, inputs, hidden0, params):
    """Fused multi-step forward.

    category: (B, 128)   inputs: (T, B, input_size)   hidden0: (B, hidden_size)
    returns  (outputs: (T, B, output_size), final_hidden: (B, hidden_size))
    """
    T, B, input_size = inputs.shape
    hidden_size = params["w_i2h"].shape[1]
    output_size = params["w_i2o"].shape[1]

    b_pad = _round_up(B, SUBLANE)
    i_pad = _round_up(input_size, LANE)
    h_pad = _round_up(hidden_size, LANE)
    o_pad = _round_up(output_size, LANE)

    w1, b1, w2, b2 = _pack_padded_params(
        params, input_size, hidden_size, output_size, i_pad, h_pad, o_pad)

    cat_p = jnp.zeros((b_pad, CATEGORY_SIZE), jnp.float32).at[:B].set(category)
    x_p = jnp.zeros((T, b_pad, i_pad), jnp.float32).at[:, :B, :input_size].set(inputs)
    h0_p = jnp.zeros((b_pad, h_pad), jnp.float32).at[:B, :hidden_size].set(hidden0)

    grid_spec = pltpu.PrefetchScalarGridSpec(
        num_scalar_prefetch=0,
        grid=(T,),
        in_specs=[
            pl.BlockSpec((b_pad, CATEGORY_SIZE), lambda t: (0, 0)),   # category (resident)
            pl.BlockSpec((1, b_pad, i_pad), lambda t: (t, 0, 0)),     # per-step input
            pl.BlockSpec((b_pad, h_pad), lambda t: (0, 0)),           # hidden0 (resident)
            pl.BlockSpec(w1.shape, lambda t: (0, 0)),                 # fused i2h|i2o W
            pl.BlockSpec(b1.shape, lambda t: (0, 0)),
            pl.BlockSpec(w2.shape, lambda t: (0, 0)),                 # o2o W
            pl.BlockSpec(b2.shape, lambda t: (0, 0)),
        ],
        out_specs=(
            pl.BlockSpec((1, b_pad, o_pad), lambda t: (t, 0, 0)),     # per-step log-probs
            pl.BlockSpec((b_pad, h_pad), lambda t: (0, 0)),           # final hidden
        ),
        scratch_shapes=[pltpu.VMEM((b_pad, h_pad), jnp.float32)],     # hidden carry
    )

    out_p, hid_p = pl.pallas_call(
        _rnn_seq_kernel,
        out_shape=(
            jax.ShapeDtypeStruct((T, b_pad, o_pad), jnp.float32),
            jax.ShapeDtypeStruct((b_pad, h_pad), jnp.float32),
        ),
        grid_spec=grid_spec,
        compiler_params=pltpu.CompilerParams(
            dimension_semantics=("arbitrary",)),   # sequential carry over time
    )(cat_p, x_p, h0_p, w1, b1, w2, b2)

    return out_p[:, :B, :output_size], hid_p[:B, :hidden_size]


def rnn_step(category, inp, hidden, params):
    """Single-step API matching the original module's forward()."""
    out, new_hidden = rnn_forward(category, inp[None], hidden, params)
    return out[0], new_hidden


# ---------------------------------------------------------------------------
# Params + pure-JAX reference
# ---------------------------------------------------------------------------
def init_params(key, input_size, hidden_size, output_size):
    """Deterministic init mirroring nn.Linear shapes (stored as [in, out])."""
    def linear(key, fan_in, fan_out):
        kw, kb = jax.random.split(key)
        bound = 1.0 / jnp.sqrt(fan_in)
        w = jax.random.uniform(kw, (fan_in, fan_out), jnp.float32, -bound, bound)
        b = jax.random.uniform(kb, (1, fan_out), jnp.float32, -bound, bound)
        return w, b

    k1, k2, k3 = jax.random.split(key, 3)
    com_size = input_size + CATEGORY_SIZE + hidden_size
    w_i2h, b_i2h = linear(k1, com_size, hidden_size)
    w_i2o, b_i2o = linear(k2, com_size, output_size)
    w_o2o, b_o2o = linear(k3, hidden_size + output_size, output_size)
    return dict(w_i2h=w_i2h, b_i2h=b_i2h,
                w_i2o=w_i2o, b_i2o=b_i2o,
                w_o2o=w_o2o, b_o2o=b_o2o)


def rnn_forward_ref(category, inputs, hidden, params):
    """Pure-JAX reference (per-step loop, unpadded params)."""
    outs = []
    for t in range(inputs.shape[0]):
        com = jnp.concatenate([category, inputs[t], hidden], axis=1)
        new_hidden = com @ params["w_i2h"] + params["b_i2h"]
        output = com @ params["w_i2o"] + params["b_i2o"]
        com_out = jnp.concatenate([new_hidden, output], axis=1)
        output = com_out @ params["w_o2o"] + params["b_o2o"]
        outs.append(jax.nn.log_softmax(output, axis=1))
        hidden = new_hidden
    return jnp.stack(outs), hidden


if __name__ == "__main__":
    input_size, hidden_size, output_size = 32, 32, 32
    batch, seq_len = 2, 8

    key = jax.random.PRNGKey(0)
    kp, kc, ki = jax.random.split(key, 3)

    params = init_params(kp, input_size, hidden_size, output_size)
    category = jax.random.normal(kc, (batch, CATEGORY_SIZE), jnp.float32)
    inputs = jax.random.normal(ki, (seq_len, batch, input_size), jnp.float32)
    hidden0 = jnp.zeros((batch, hidden_size), jnp.float32)   # initHidden()

    out, new_hidden = jax.jit(rnn_forward)(category, inputs, hidden0, params)
    jax.block_until_ready((out, new_hidden))

    ref_out, ref_hidden = rnn_forward_ref(category, inputs, hidden0, params)
    assert out.shape == (seq_len, batch, output_size)
    assert new_hidden.shape == (batch, hidden_size)
    assert jnp.allclose(out, ref_out, atol=1e-4, rtol=1e-4), \
        float(jnp.max(jnp.abs(out - ref_out)))
    assert jnp.allclose(new_hidden, ref_hidden, atol=1e-4, rtol=1e-4), \
        float(jnp.max(jnp.abs(new_hidden - ref_hidden)))

    # Single-step API check (matches original module's forward signature).
    out1, hid1 = rnn_step(category, inputs[0], hidden0, params)
    assert jnp.allclose(out1, ref_out[0], atol=1e-4, rtol=1e-4)

    print("KERNEL_OK")
</pallas_src>

<mosaic_0001>
module attributes {stable_mosaic.version = 11 : i64} {
  func.func @_rnn_seq_kernel(%arg0: i32, %arg1: memref<8x128xf32, #tpu.memory_space<vmem>>, %arg2: memref<1x8x128xf32, #tpu.memory_space<vmem>>, %arg3: memref<8x128xf32, #tpu.memory_space<vmem>>, %arg4: memref<384x256xf32, #tpu.memory_space<vmem>>, %arg5: memref<1x256xf32, #tpu.memory_space<vmem>>, %arg6: memref<256x128xf32, #tpu.memory_space<vmem>>, %arg7: memref<1x128xf32, #tpu.memory_space<vmem>>, %arg8: memref<1x8x128xf32, #tpu.memory_space<vmem>>, %arg9: memref<8x128xf32, #tpu.memory_space<vmem>>, %arg10: memref<8x128xf32, #tpu.memory_space<vmem>>) attributes {dimension_semantics = [#tpu.dimension_semantics<arbitrary>], iteration_bounds = array<i64: 8>, scalar_prefetch = 0 : i64, scratch_operands = 1 : i64, tpu.core_type = #tpu.core_type<tc>, window_params = [{pipeline_mode = #tpu.pipeline_mode<synchronous>, transform_indices = @transform_0, window_bounds = array<i64: 8, 128>}, {transform_indices = @transform_1, window_bounds = array<i64: 1, 8, 128>}, {pipeline_mode = #tpu.pipeline_mode<synchronous>, transform_indices = @transform_2, window_bounds = array<i64: 8, 128>}, {pipeline_mode = #tpu.pipeline_mode<synchronous>, transform_indices = @transform_3, window_bounds = array<i64: 384, 256>}, {pipeline_mode = #tpu.pipeline_mode<synchronous>, transform_indices = @transform_4, window_bounds = array<i64: 1, 256>}, {pipeline_mode = #tpu.pipeline_mode<synchronous>, transform_indices = @transform_5, window_bounds = array<i64: 256, 128>}, {pipeline_mode = #tpu.pipeline_mode<synchronous>, transform_indices = @transform_6, window_bounds = array<i64: 1, 128>}, {transform_indices = @transform_7, window_bounds = array<i64: 1, 8, 128>}, {pipeline_mode = #tpu.pipeline_mode<synchronous>, transform_indices = @transform_8, window_bounds = array<i64: 8, 128>}]} {
    %c0_i32 = arith.constant 0 : i32
    %0 = arith.cmpi eq, %arg0, %c0_i32 : i32
    %1 = arith.extui %0 : i1 to i32
    %c0_i32_0 = arith.constant 0 : i32
    %2 = arith.cmpi ne, %1, %c0_i32_0 : i32
    scf.if %2 {
      %c0_29 = arith.constant 0 : index
      %c0_30 = arith.constant 0 : index
      %39 = vector.load %arg3[%c0_29, %c0_30] : memref<8x128xf32, #tpu.memory_space<vmem>>, vector<8x128xf32>
      %c0_31 = arith.constant 0 : index
      %c0_32 = arith.constant 0 : index
      %40 = vector.load %arg10[%c0_31, %c0_32] : memref<8x128xf32, #tpu.memory_space<vmem>>, vector<8x128xf32>
      tpu.vector_store %arg10[%c0_31, %c0_32], %39 {strides = array<i32>} : memref<8x128xf32, #tpu.memory_space<vmem>>, vector<8x128xf32>,
    } else {
    }
    %c0 = arith.constant 0 : index
    %c0_1 = arith.constant 0 : index
    %3 = vector.load %arg1[%c0, %c0_1] : memref<8x128xf32, #tpu.memory_space<vmem>>, vector<8x128xf32>
    %c0_2 = arith.constant 0 : index
    %c0_3 = arith.constant 0 : index
    %c0_4 = arith.constant 0 : index
    %4 = vector.load %arg2[%c0_2, %c0_3, %c0_4] : memref<1x8x128xf32, #tpu.memory_space<vmem>>, vector<1x8x128xf32>
    %5 = vector.shape_cast %4 : vector<1x8x128xf32> to vector<8x128xf32>
    %c0_5 = arith.constant 0 : index
    %c0_6 = arith.constant 0 : index
    %6 = vector.load %arg10[%c0_5, %c0_6] : memref<8x128xf32, #tpu.memory_space<vmem>>, vector<8x128xf32>
    %c0_7 = arith.constant 0 : index
    %c0_8 = arith.constant 0 : index
    %7 = vector.load %arg4[%c0_7, %c0_8] : memref<384x256xf32, #tpu.memory_space<vmem>>, vector<128x256xf32>
    %cst = arith.constant dense<0.000000e+00> : vector<8x256xf32>
    %8 = tpu.matmul %3, %7, %cst {dimension_numbers = #tpu.dot_dimension_numbers<[1], [0], [0], [1], [0, 0, 1, 1], [], []>} : vector<8x128xf32>, vector<128x256xf32>, vector<8x256xf32> -> vector<8x256xf32>
    %c128 = arith.constant 128 : index
    %c0_9 = arith.constant 0 : index
    %9 = vector.load %arg4[%c128, %c0_9] : memref<384x256xf32, #tpu.memory_space<vmem>>, vector<128x256xf32>
    %cst_10 = arith.constant dense<0.000000e+00> : vector<8x256xf32>
    %10 = tpu.matmul %5, %9, %cst_10 {dimension_numbers = #tpu.dot_dimension_numbers<[1], [0], [0], [1], [0, 0, 1, 1], [], []>} : vector<8x128xf32>, vector<128x256xf32>, vector<8x256xf32> -> vector<8x256xf32>
    %11 = arith.addf %8, %10 : vector<8x256xf32>
    %c256 = arith.constant 256 : index
    %c0_11 = arith.constant 0 : index
    %12 = vector.load %arg4[%c256, %c0_11] : memref<384x256xf32, #tpu.memory_space<vmem>>, vector<128x256xf32>
    %cst_12 = arith.constant dense<0.000000e+00> : vector<8x256xf32>
    %13 = tpu.matmul %6, %12, %cst_12 {dimension_numbers = #tpu.dot_dimension_numbers<[1], [0], [0], [1], [0, 0, 1, 1], [], []>} : vector<8x128xf32>, vector<128x256xf32>, vector<8x256xf32> -> vector<8x256xf32>
    %14 = arith.addf %11, %13 : vector<8x256xf32>
    %c0_13 = arith.constant 0 : index
    %c0_14 = arith.constant 0 : index
    %15 = vector.load %arg5[%c0_13, %c0_14] : memref<1x256xf32, #tpu.memory_space<vmem>>, vector<1x256xf32>
    %16 = vector.broadcast %15 : vector<1x256xf32> to vector<8x256xf32>
    %17 = arith.addf %14, %16 : vector<8x256xf32>
    %18 = vector.extract_strided_slice %17 {offsets = [0, 0], sizes = [8, 128], strides = [1, 1]} : vector<8x256xf32> to vector<8x128xf32>
    %c0_15 = arith.constant 0 : index
    %c0_16 = arith.constant 0 : index
    %19 = vector.load %arg6[%c0_15, %c0_16] : memref<256x128xf32, #tpu.memory_space<vmem>>, vector<256x128xf32>
    %cst_17 = arith.constant dense<0.000000e+00> : vector<8x128xf32>
    %20 = tpu.matmul %17, %19, %cst_17 {dimension_numbers = #tpu.dot_dimension_numbers<[1], [0], [0], [1], [0, 0, 1, 1], [], []>} : vector<8x256xf32>, vector<256x128xf32>, vector<8x128xf32> -> vector<8x128xf32>
    %c0_18 = arith.constant 0 : index
    %c0_19 = arith.constant 0 : index
    %21 = vector.load %arg7[%c0_18, %c0_19] : memref<1x128xf32, #tpu.memory_space<vmem>>, vector<1x128xf32>
    %22 = vector.broadcast %21 : vector<1x128xf32> to vector<8x128xf32>
    %23 = arith.addf %20, %22 : vector<8x128xf32>
    %cst_20 = arith.constant dense<0xFF800000> : vector<8xf32>
    %24 = vector.multi_reduction <maximumf>, %23, %cst_20 [1] : vector<8x128xf32> to vector<8xf32>
    %25 = vector.shape_cast %24 : vector<8xf32> to vector<8x1xf32>
    %26 = vector.broadcast %25 : vector<8x1xf32> to vector<8x128xf32>
    %27 = arith.subf %23, %26 : vector<8x128xf32>
    %28 = math.exp %27 : vector<8x128xf32>
    %cst_21 = arith.constant dense<0.000000e+00> : vector<8xf32>
    %29 = vector.multi_reduction <add>, %28, %cst_21 [1] : vector<8x128xf32> to vector<8xf32>
    %30 = vector.shape_cast %29 : vector<8xf32> to vector<8x1xf32>
    %31 = math.log %30 : vector<8x1xf32>
    %32 = vector.broadcast %31 : vector<8x1xf32> to vector<8x128xf32>
    %33 = arith.subf %27, %32 : vector<8x128xf32>
    %c0_22 = arith.constant 0 : index
    %c0_23 = arith.constant 0 : index
    %c0_24 = arith.constant 0 : index
    %34 = vector.load %arg8[%c0_22, %c0_23, %c0_24] : memref<1x8x128xf32, #tpu.memory_space<vmem>>, vector<1x8x128xf32>
    %35 = vector.shape_cast %34 : vector<1x8x128xf32> to vector<8x128xf32>
    %36 = vector.shape_cast %33 : vector<8x128xf32> to vector<1x8x128xf32>
    tpu.vector_store %arg8[%c0_22, %c0_23, %c0_24], %36 {strides = array<i32>} : memref<1x8x128xf32, #tpu.memory_space<vmem>>, vector<1x8x128xf32>,
    %c0_25 = arith.constant 0 : index
    %c0_26 = arith.constant 0 : index
    %37 = vector.load %arg10[%c0_25, %c0_26] : memref<8x128xf32, #tpu.memory_space<vmem>>, vector<8x128xf32>
    tpu.vector_store %arg10[%c0_25, %c0_26], %18 {strides = array<i32>} : memref<8x128xf32, #tpu.memory_space<vmem>>, vector<8x128xf32>,
    %c0_27 = arith.constant 0 : index
    %c0_28 = arith.constant 0 : index
    %38 = vector.load %arg9[%c0_27, %c0_28] : memref<8x128xf32, #tpu.memory_space<vmem>>, vector<8x128xf32>
    tpu.vector_store %arg9[%c0_27, %c0_28], %18 {strides = array<i32>} : memref<8x128xf32, #tpu.memory_space<vmem>>, vector<8x128xf32>,
    return
  }
  func.func @transform_0(%arg0: i32) -> (i32, i32) {
    %c0_i32 = arith.constant 0 : i32
    %c0_i32_0 = arith.constant 0 : i32
    %c0_i32_1 = arith.constant 0 : i32
    return %c0_i32, %c0_i32_0 : i32, i32
  }
  func.func @transform_1(%arg0: i32) -> (i32, i32, i32) {
    %c0_i32 = arith.constant 0 : i32
    %c0_i32_0 = arith.constant 0 : i32
    %c0_i32_1 = arith.constant 0 : i32
    return %arg0, %c0_i32, %c0_i32_0 : i32, i32, i32
  }
  func.func @transform_2(%arg0: i32) -> (i32, i32) {
    %c0_i32 = arith.constant 0 : i32
    %c0_i32_0 = arith.constant 0 : i32
    %c0_i32_1 = arith.constant 0 : i32
    return %c0_i32, %c0_i32_0 : i32, i32
  }
  func.func @transform_3(%arg0: i32) -> (i32, i32) {
    %c0_i32 = arith.constant 0 : i32
    %c0_i32_0 = arith.constant 0 : i32
    %c0_i32_1 = arith.constant 0 : i32
    return %c0_i32, %c0_i32_0 : i32, i32
  }
  func.func @transform_4(%arg0: i32) -> (i32, i32) {
    %c0_i32 = arith.constant 0 : i32
    %c0_i32_0 = arith.constant 0 : i32
    %c0_i32_1 = arith.constant 0 : i32
    return %c0_i32, %c0_i32_0 : i32, i32
  }
  func.func @transform_5(%arg0: i32) -> (i32, i32) {
    %c0_i32 = arith.constant 0 : i32
    %c0_i32_0 = arith.constant 0 : i32
    %c0_i32_1 = arith.constant 0 : i32
    return %c0_i32, %c0_i32_0 : i32, i32
  }
  func.func @transform_6(%arg0: i32) -> (i32, i32) {
    %c0_i32 = arith.constant 0 : i32
    %c0_i32_0 = arith.constant 0 : i32
    %c0_i32_1 = arith.constant 0 : i32
    return %c0_i32, %c0_i32_0 : i32, i32
  }
  func.func @transform_7(%arg0: i32) -> (i32, i32, i32) {
    %c0_i32 = arith.constant 0 : i32
    %c0_i32_0 = arith.constant 0 : i32
    %c0_i32_1 = arith.constant 0 : i32
    return %arg0, %c0_i32, %c0_i32_0 : i32, i32, i32
  }
  func.func @transform_8(%arg0: i32) -> (i32, i32) {
    %c0_i32 = arith.constant 0 : i32
    %c0_i32_0 = arith.constant 0 : i32
    %c0_i32_1 = arith.constant 0 : i32
    return %c0_i32, %c0_i32_0 : i32, i32
  }
}

</mosaic_0001>

<llo_original>
// kernel: rnn_forward.1
$region0: #{rnn_forward.1}
  #allocation0 [shape = 'u32[]', space=smem, size = 0x4, offset = 0x4, fixed_abs, tag = 'smem constant byte address 0x4 - core index']
  #allocation1 [shape = 'u32[72,128]{1,0:T(1,128)}', space=vmem, size = 0x9000, scoped, tag = 'internal scratch']
  #allocation2 [shape = 'f32[8,128]{1,0:T(8,128)}', space=vmem, size = 0x1000, scoped, tag = 'scratch operand']
  %s0 = inlined_call_operand.vmem [shape: f32[8,128], index: 0, kind: input, shape index: {}]
  %s1 = inlined_call_operand.vmem [shape: f32[8,8,128], index: 1, kind: input, shape index: {}]
  %s2 = inlined_call_operand.vmem [shape: f32[8,128], index: 2, kind: input, shape index: {}]
  %s3 = inlined_call_operand.vmem [shape: f32[384,256], index: 3, kind: input, shape index: {}]
  %s4 = inlined_call_operand.vmem [shape: f32[1,256], index: 4, kind: input, shape index: {}]
  %s5 = inlined_call_operand.vmem [shape: f32[256,128], index: 5, kind: input, shape index: {}]
  %s6 = inlined_call_operand.vmem [shape: f32[1,128], index: 6, kind: input, shape index: {}]
  %s7 = inlined_call_operand.vmem [shape: f32[8,8,128], index: 7, kind: output, shape index: {0}]
  %s8 = inlined_call_operand.vmem [shape: f32[8,128], index: 8, kind: output, shape index: {1}]
  %9 = xla_tuple %s7, %s8
  %s10 = sld [smem:[#allocation0]]
  $region73: #{rnn_forward.1} parent=0
    _
  %s12 = ssub.s32 1, %s10
  %s13 = scalar_select 0, %s12, %s10
  loop: start=0, step=1, limit=10
  $region2: #{rnn_forward.1} parent=0 // loop_pre_header
    _
  $region3: #{rnn_forward.1} parent=0 // loop_header
    %s15 = sphi 0, %s19
    %p16 = scmp.ge.s32.totalorder %s15, 10
    %s23 = sphi 0, %s23
    %s25 = sphi 0, %s23
    %s26 = sphi 0, %s25
    %s40 = sphi 0, %s26
    %s46 = sphi 0, %s48
    %s49 = sphi 0, %s46
    %s50 = sphi 0, %s49
    %s66 = sphi 0, %s50
    %s70 = sphi 0, %s70
    %s72 = sphi 0, %s70
    %s73 = sphi 0, %s72
    %s87 = sphi 0, %s73
    %s91 = sphi 0, %s91
    %s93 = sphi 0, %s91
    %s94 = sphi 0, %s93
    %s108 = sphi 0, %s94
    %s112 = sphi 0, %s112
    %s114 = sphi 0, %s112
    %s115 = sphi 0, %s114
    %s129 = sphi 0, %s115
    %s133 = sphi 0, %s133
    %s135 = sphi 0, %s133
    %s136 = sphi 0, %s135
    %s150 = sphi 0, %s136
    %s154 = sphi 0, %s154
    %s156 = sphi 0, %s154
    %s157 = sphi 0, %s156
    %s171 = sphi 0, %s157
    %s177 = sphi 0, %s179
    %s180 = sphi 0, %s177
    %s181 = sphi 0, %s180
    %s197 = sphi 0, %s181
    %s201 = sphi 0, %s201
    %s203 = sphi 0, %s201
    %s204 = sphi 0, %s203
    %s218 = sphi 0, %s204
  $region4: #{rnn_forward.1} parent=0 // loop_header_branch
    %18 = sbr.rel (%p16) target = $region8
  $region5: #{rnn_forward.1} parent=0 // loop_body
    %s20 = ssub.s32 %s15, 1
    %s21 = ssub.s32 %s15, 2
    %s22 = sadd.s32 %s15, 1
    %s24 = sadd.s32 %s23, 1
    %p27 = scmp.eq.s32.totalorder %s15, 7
    %p28 = scmp.ne.s32.totalorder %s23, %s25
    %p29 = scmp.eq.s32.totalorder %s15, 0
    %p30 = por %p28, %p29
    %p31 = scmp.ne.s32.totalorder %s23, %s25
    %p32 = scmp.eq.s32.totalorder %s20, 7
    %p33 = por %p31, %p32
    %p34 = scmp.ne.s32.totalorder %s25, %s26
    %p35 = scmp.eq.s32.totalorder %s20, 0
    %p36 = por %p34, %p35
    %p37 = scmp.ne.s32.totalorder %s25, %s26
    %p38 = scmp.eq.s32.totalorder %s21, 7
    %p39 = por %p37, %p38
    %p41 = scmp.ne.s32.totalorder %s26, %s40
    %p42 = scmp.eq.s32.totalorder %s21, 0
    %p43 = por %p41, %p42
    %s44 = ssub.s32 %s15, %s22
    %p45 = scmp.eq.s32.totalorder %s44, 0
    %s47 = sadd.s32 %s46, 1
    %s48 = scalar_select %p45, %s46, %s47
    %p51 = pneg %p45
    %p52 = scmp.eq.s32.totalorder %s15, 7
    %p53 = por %p51, %p52
    %p54 = scmp.ne.s32.totalorder %s46, %s49
    %p55 = scmp.eq.s32.totalorder %s15, 0
    %p56 = por %p54, %p55
    %p57 = scmp.ne.s32.totalorder %s46, %s49
    %p58 = scmp.eq.s32.totalorder %s20, 7
    %p59 = por %p57, %p58
    %p60 = scmp.ne.s32.totalorder %s49, %s50
    %p61 = scmp.eq.s32.totalorder %s20, 0
    %p62 = por %p60, %p61
    %p63 = scmp.ne.s32.totalorder %s49, %s50
    %p64 = scmp.eq.s32.totalorder %s21, 7
    %p65 = por %p63, %p64
    %p67 = scmp.ne.s32.totalorder %s50, %s66
    %p68 = scmp.eq.s32.totalorder %s21, 0
    %p69 = por %p67, %p68
    %s71 = sadd.s32 %s70, 1
    %p74 = scmp.eq.s32.totalorder %s15, 7
    %p75 = scmp.ne.s32.totalorder %s70, %s72
    %p76 = scmp.eq.s32.totalorder %s15, 0
    %p77 = por %p75, %p76
    %p78 = scmp.ne.s32.totalorder %s70, %s72
    %p79 = scmp.eq.s32.totalorder %s20, 7
    %p80 = por %p78, %p79
    %p81 = scmp.ne.s32.totalorder %s72, %s73
    %p82 = scmp.eq.s32.totalorder %s20, 0
    %p83 = por %p81, %p82
    %p84 = scmp.ne.s32.totalorder %s72, %s73
    %p85 = scmp.eq.s32.totalorder %s21, 7
    %p86 = por %p84, %p85
    %p88 = scmp.ne.s32.totalorder %s73, %s87
    %p89 = scmp.eq.s32.totalorder %s21, 0
    %p90 = por %p88, %p89
    %s92 = sadd.s32 %s91, 1
    %p95 = scmp.eq.s32.totalorder %s15, 7
    %p96 = scmp.ne.s32.totalorder %s91, %s93
    %p97 = scmp.eq.s32.totalorder %s15, 0
    %p98 = por %p96, %p97
    %p99 = scmp.ne.s32.totalorder %s91, %s93
    %p100 = scmp.eq.s32.totalorder %s20, 7
    %p101 = por %p99, %p100
    %p102 = scmp.ne.s32.totalorder %s93, %s94
    %p103 = scmp.eq.s32.totalorder %s20, 0
    %p104 = por %p102, %p103
    %p105 = scmp.ne.s32.totalorder %s93, %s94
    %p106 = scmp.eq.s32.totalorder %s21, 7
    %p107 = por %p105, %p106
    %p109 = scmp.ne.s32.totalorder %s94, %s108
    %p110 = scmp.eq.s32.totalorder %s21, 0
    %p111 = por %p109, %p110
    %s113 = sadd.s32 %s112, 1
    %p116 = scmp.eq.s32.totalorder %s15, 7
    %p117 = scmp.ne.s32.totalorder %s112, %s114
    %p118 = scmp.eq.s32.totalorder %s15, 0
    %p119 = por %p117, %p118
    %p120 = scmp.ne.s32.totalorder %s112, %s114
    %p121 = scmp.eq.s32.totalorder %s20, 7
    %p122 = por %p120, %p121
    %p123 = scmp.ne.s32.totalorder %s114, %s115
    %p124 = scmp.eq.s32.totalorder %s20, 0
    %p125 = por %p123, %p124
    %p126 = scmp.ne.s32.totalorder %s114, %s115
    %p127 = scmp.eq.s32.totalorder %s21, 7
    %p128 = por %p126, %p127
    %p130 = scmp.ne.s32.totalorder %s115, %s129
    %p131 = scmp.eq.s32.totalorder %s21, 0
    %p132 = por %p130, %p131
    %s134 = sadd.s32 %s133, 1
    %p137 = scmp.eq.s32.totalorder %s15, 7
    %p138 = scmp.ne.s32.totalorder %s133, %s135
    %p139 = scmp.eq.s32.totalorder %s15, 0
    %p140 = por %p138, %p139
    %p141 = scmp.ne.s32.totalorder %s133, %s135
    %p142 = scmp.eq.s32.totalorder %s20, 7
    %p143 = por %p141, %p142
    %p144 = scmp.ne.s32.totalorder %s135, %s136
    %p145 = scmp.eq.s32.totalorder %s20, 0
    %p146 = por %p144, %p145
    %p147 = scmp.ne.s32.totalorder %s135, %s136
    %p148 = scmp.eq.s32.totalorder %s21, 7
    %p149 = por %p147, %p148
    %p151 = scmp.ne.s32.totalorder %s136, %s150
    %p152 = scmp.eq.s32.totalorder %s21, 0
    %p153 = por %p151, %p152
    %s155 = sadd.s32 %s154, 1
    %p158 = scmp.eq.s32.totalorder %s15, 7
    %p159 = scmp.ne.s32.totalorder %s154, %s156
    %p160 = scmp.eq.s32.totalorder %s15, 0
    %p161 = por %p159, %p160
    %p162 = scmp.ne.s32.totalorder %s154, %s156
    %p163 = scmp.eq.s32.totalorder %s20, 7
    %p164 = por %p162, %p163
    %p165 = scmp.ne.s32.totalorder %s156, %s157
    %p166 = scmp.eq.s32.totalorder %s20, 0
    %p167 = por %p165, %p166
    %p168 = scmp.ne.s32.totalorder %s156, %s157
    %p169 = scmp.eq.s32.totalorder %s21, 7
    %p170 = por %p168, %p169
    %p172 = scmp.ne.s32.totalorder %s157, %s171
    %p173 = scmp.eq.s32.totalorder %s21, 0
    %p174 = por %p172, %p173
    %s175 = ssub.s32 %s15, %s22
    %p176 = scmp.eq.s32.totalorder %s175, 0
    %s178 = sadd.s32 %s177, 1
    %s179 = scalar_select %p176, %s177, %s178
    %p182 = pneg %p176
    %p183 = scmp.eq.s32.totalorder %s15, 7
    %p184 = por %p182, %p183
    %p185 = scmp.ne.s32.totalorder %s177, %s180
    %p186 = scmp.eq.s32.totalorder %s15, 0
    %p187 = por %p185, %p186
    %p188 = scmp.ne.s32.totalorder %s177, %s180
    %p189 = scmp.eq.s32.totalorder %s20, 7
    %p190 = por %p188, %p189
    %p191 = scmp.ne.s32.totalorder %s180, %s181
    %p192 = scmp.eq.s32.totalorder %s20, 0
    %p193 = por %p191, %p192
    %p194 = scmp.ne.s32.totalorder %s180, %s181
    %p195 = scmp.eq.s32.totalorder %s21, 7
    %p196 = por %p194, %p195
    %p198 = scmp.ne.s32.totalorder %s181, %s197
    %p199 = scmp.eq.s32.totalorder %s21, 0
    %p200 = por %p198, %p199
    %s202 = sadd.s32 %s201, 1
    %p205 = scmp.eq.s32.totalorder %s15, 7
    %p206 = scmp.ne.s32.totalorder %s201, %s203
    %p207 = scmp.eq.s32.totalorder %s15, 0
    %p208 = por %p206, %p207
    %p209 = scmp.ne.s32.totalorder %s201, %s203
    %p210 = scmp.eq.s32.totalorder %s20, 7
    %p211 = por %p209, %p210
    %p212 = scmp.ne.s32.totalorder %s203, %s204
    %p213 = scmp.eq.s32.totalorder %s20, 0
    %p214 = por %p212, %p213
    %p215 = scmp.ne.s32.totalorder %s203, %s204
    %p216 = scmp.eq.s32.totalorder %s21, 7
    %p217 = por %p215, %p216
    %p219 = scmp.ne.s32.totalorder %s204, %s218
    %p220 = scmp.eq.s32.totalorder %s21, 0
    %p221 = por %p219, %p220
    %p222 = scmp.le.s32.totalorder 1, %s15
    %p223 = scmp.lt.s32.totalorder %s15, 9
    %p224 = pnand %p222, %p223
    %p225 = pneg %p224
    // Predicated region
    $region9: #{rnn_forward.1} parent=5 // pred_check
      _
    $region10: #{rnn_forward.1} parent=5 // pred_check_branch
      %227 = sbr.rel (%p224) target = $region12
    $region11: #{rnn_forward.1} parent=5 // pred_region
      %s228 = ssub.s32 %s15, 1
      // Predicated region
      $region13: #{rnn_forward.1} parent=11 // pred_check
        %p229 = pneg %p36
      $region14: #{rnn_forward.1} parent=11 // pred_check_branch
        %231 = sbr.rel (%p229) target = $region16
      $region15: #{rnn_forward.1} parent=11 // pred_region
        _
      $region16: #{rnn_forward.1} parent=11 // pred_fallthru
        _
      // Predicated region
      $region17: #{rnn_forward.1} parent=11 // pred_check
        %p232 = pneg %p83
      $region18: #{rnn_forward.1} parent=11 // pred_check_branch
        %234 = sbr.rel (%p232) target = $region20
      $region19: #{rnn_forward.1} parent=11 // pred_region
        _
      $region20: #{rnn_forward.1} parent=11 // pred_fallthru
        _
      // Predicated region
      $region21: #{rnn_forward.1} parent=11 // pred_check
        %p235 = pneg %p104
      $region22: #{rnn_forward.1} parent=11 // pred_check_branch
        %237 = sbr.rel (%p235) target = $region24
      $region23: #{rnn_forward.1} parent=11 // pred_region
        _
      $region24: #{rnn_forward.1} parent=11 // pred_fallthru
        _
      // Predicated region
      $region25: #{rnn_forward.1} parent=11 // pred_check
        %p238 = pneg %p125
      $region26: #{rnn_forward.1} parent=11 // pred_check_branch
        %240 = sbr.rel (%p238) target = $region28
      $region27: #{rnn_forward.1} parent=11 // pred_region
        _
      $region28: #{rnn_forward.1} parent=11 // pred_fallthru
        _
      // Predicated region
      $region29: #{rnn_forward.1} parent=11 // pred_check
        %p241 = pneg %p146
      $region30: #{rnn_forward.1} parent=11 // pred_check_branch
        %243 = sbr.rel (%p241) target = $region32
      $region31: #{rnn_forward.1} parent=11 // pred_region
        _
      $region32: #{rnn_forward.1} parent=11 // pred_fallthru
        _
      // Predicated region
      $region33: #{rnn_forward.1} parent=11 // pred_check
        %p244 = pneg %p167
      $region34: #{rnn_forward.1} parent=11 // pred_check_branch
        %246 = sbr.rel (%p244) target = $region36
      $region35: #{rnn_forward.1} parent=11 // pred_region
        _
      $region36: #{rnn_forward.1} parent=11 // pred_fallthru
        _
    $region12: #{rnn_forward.1} parent=5 // pred_fallthru
      _
    %p247 = scmp.lt.s32.totalorder %s15, 8
    // Predicated region
    $region37: #{rnn_forward.1} parent=5 // pred_check
      %p248 = pneg %p247
    $region38: #{rnn_forward.1} parent=5 // pred_check_branch
      %250 = sbr.rel (%p248) target = $region40
    $region39: #{rnn_forward.1} parent=5 // pred_region
      // Predicated region
      $region41: #{rnn_forward.1} parent=39 // pred_check
        %p251 = pneg %p56
      $region42: #{rnn_forward.1} parent=39 // pred_check_branch
        %253 = sbr.rel (%p251) target = $region44
      $region43: #{rnn_forward.1} parent=39 // pred_region
        %p254 = scmp.lt.s32.totalorder %s15, 7
        %s255 = scalar_select %p254, %s15, 7
        %s256 = smul.addr %s255, 8
        %s257 = scalar_lea.vmem %s1, %s256
      $region44: #{rnn_forward.1} parent=39 // pred_fallthru
        _
    $region40: #{rnn_forward.1} parent=5 // pred_fallthru
      _
    %p258 = scmp.le.s32.totalorder 1, %s15
    %p259 = scmp.lt.s32.totalorder %s15, 9
    %p260 = pnand %p258, %p259
    %p261 = pneg %p260
    // Predicated region
    $region45: #{rnn_forward.1} parent=5 // pred_check
      _
    $region46: #{rnn_forward.1} parent=5 // pred_check_branch
      %263 = sbr.rel (%p260) target = $region48
    $region47: #{rnn_forward.1} parent=5 // pred_region
      %s264 = ssub.s32 %s15, 1
      %p265 = pneg %p36
      %p266 = pneg %p33
      %p267 = scmp.lt.s32.totalorder %s20, 7
      %s268 = scalar_select %p267, %s20, 7
      %s269 = smul.addr %s268, 8
      %s270 = scalar_lea.vmem %s1, %s269
      %p271 = pneg %p62
      %p272 = pneg %p59
      %p273 = pneg %p83
      %p274 = pneg %p80
      %p275 = pneg %p104
      %p276 = pneg %p101
      %p277 = pneg %p125
      %p278 = pneg %p122
      %p279 = pneg %p146
      %p280 = pneg %p143
      %p281 = pneg %p167
      %p282 = pneg %p164
      %p283 = pneg %p193
      %p284 = pneg %p190
      %p285 = scmp.lt.s32.totalorder %s20, 7
      %s286 = scalar_select %p285, %s20, 7
      %s287 = smul.addr %s286, 8
      %s288 = scalar_lea.vmem %s7, %s287
      %p289 = pneg %p214
      %p290 = pneg %p211
      %p291 = scmp.lt.s32.totalorder %s20, 7
      %s292 = scalar_select %p291, %s20, 7
      %s293 = smul.addr %s292, 8
      %s294 = scalar_lea.vmem %s1, %s293
      %p295 = scmp.lt.s32.totalorder %s20, 7
      %s296 = scalar_select %p295, %s20, 7
      %s297 = smul.addr %s296, 8
      %s298 = scalar_lea.vmem %s7, %s297
      %p299 = scmp.eq.s32.totalorder %s20, 0
      // Predicated region
      $region49: #{rnn_forward.1} parent=47 // pred_check
        %p300 = pneg %p299
      $region50: #{rnn_forward.1} parent=47 // pred_check_branch
        %302 = sbr.rel (%p300) target = $region52
      $region51: #{rnn_forward.1} parent=47 // pred_region
        %v303 = vld [vmem:[%s2] sm:$0xff]
        %304 = vst [vmem:[#allocation2] sm:$0xff] %v303
      $region52: #{rnn_forward.1} parent=47 // pred_fallthru
        _
      %v305 = vld [vmem:[%s0] sm:$0xff]
      %v306 = vld [vmem:[%s294] sm:$0xff]
      %v307 = vld [vmem:[#allocation2] sm:$0xff]
      %v308 = vld [vmem:[%s3] sm:$0xff]
      %v309 = vld [vmem:[%s3 + $0x8] sm:$0xff]
      %v310 = vld [vmem:[%s3 + $0x10] sm:$0xff]
      %v311 = vld [vmem:[%s3 + $0x18] sm:$0xff]
      %v312 = vld [vmem:[%s3 + $0x20] sm:$0xff]
      %v313 = vld [vmem:[%s3 + $0x28] sm:$0xff]
      %v314 = vld [vmem:[%s3 + $0x30] sm:$0xff]
      %v315 = vld [vmem:[%s3 + $0x38] sm:$0xff]
      %v316 = vld [vmem:[%s3 + $0x40] sm:$0xff]
      %v317 = vld [vmem:[%s3 + $0x48] sm:$0xff]
      %v318 = vld [vmem:[%s3 + $0x50] sm:$0xff]
      %v319 = vld [vmem:[%s3 + $0x58] sm:$0xff]
      %v320 = vld [vmem:[%s3 + $0x60] sm:$0xff]
      %v321 = vld [vmem:[%s3 + $0x68] sm:$0xff]
      %v322 = vld [vmem:[%s3 + $0x70] sm:$0xff]
      %v323 = vld [vmem:[%s3 + $0x78] sm:$0xff]
      %v324 = vld [vmem:[%s3 + $0x80] sm:$0xff]
      %v325 = vld [vmem:[%s3 + $0x88] sm:$0xff]
      %v326 = vld [vmem:[%s3 + $0x90] sm:$0xff]
      %v327 = vld [vmem:[%s3 + $0x98] sm:$0xff]
      %v328 = vld [vmem:[%s3 + $0xa0] sm:$0xff]
      %v329 = vld [vmem:[%s3 + $0xa8] sm:$0xff]
      %v330 = vld [vmem:[%s3 + $0xb0] sm:$0xff]
      %v331 = vld [vmem:[%s3 + $0xb8] sm:$0xff]
      %v332 = vld [vmem:[%s3 + $0xc0] sm:$0xff]
      %v333 = vld [vmem:[%s3 + $0xc8] sm:$0xff]
      %v334 = vld [vmem:[%s3 + $0xd0] sm:$0xff]
      %v335 = vld [vmem:[%s3 + $0xd8] sm:$0xff]
      %v336 = vld [vmem:[%s3 + $0xe0] sm:$0xff]
      %v337 = vld [vmem:[%s3 + $0xe8] sm:$0xff]
      %v338 = vld [vmem:[%s3 + $0xf0] sm:$0xff]
      %v339 = vld [vmem:[%s3 + $0xf8] sm:$0xff]
      %v340 = vld [vmem:[%s3 + $0x100] sm:$0xff]
      %v341 = vld [vmem:[%s3 + $0x108] sm:$0xff]
      %v342 = vld [vmem:[%s3 + $0x110] sm:$0xff]
      %v343 = vld [vmem:[%s3 + $0x118] sm:$0xff]
      %v344 = vld [vmem:[%s3 + $0x120] sm:$0xff]
      %v345 = vld [vmem:[%s3 + $0x128] sm:$0xff]
      %v346 = vld [vmem:[%s3 + $0x130] sm:$0xff]
      %v347 = vld [vmem:[%s3 + $0x138] sm:$0xff]
      %v348 = vld [vmem:[%s3 + $0x140] sm:$0xff]
      %v349 = vld [vmem:[%s3 + $0x148] sm:$0xff]
      %v350 = vld [vmem:[%s3 + $0x150] sm:$0xff]
      %v351 = vld [vmem:[%s3 + $0x158] sm:$0xff]
      %v352 = vld [vmem:[%s3 + $0x160] sm:$0xff]
      %v353 = vld [vmem:[%s3 + $0x168] sm:$0xff]
      %v354 = vld [vmem:[%s3 + $0x170] sm:$0xff]
      %v355 = vld [vmem:[%s3 + $0x178] sm:$0xff]
      %v356 = vld [vmem:[%s3 + $0x180] sm:$0xff]
      %v357 = vld [vmem:[%s3 + $0x188] sm:$0xff]
      %v358 = vld [vmem:[%s3 + $0x190] sm:$0xff]
      %v359 = vld [vmem:[%s3 + $0x198] sm:$0xff]
      %v360 = vld [vmem:[%s3 + $0x1a0] sm:$0xff]
      %v361 = vld [vmem:[%s3 + $0x1a8] sm:$0xff]
      %v362 = vld [vmem:[%s3 + $0x1b0] sm:$0xff]
      %v363 = vld [vmem:[%s3 + $0x1b8] sm:$0xff]
      %v364 = vld [vmem:[%s3 + $0x1c0] sm:$0xff]
      %v365 = vld [vmem:[%s3 + $0x1c8] sm:$0xff]
      %v366 = vld [vmem:[%s3 + $0x1d0] sm:$0xff]
      %v367 = vld [vmem:[%s3 + $0x1d8] sm:$0xff]
      %v368 = vld [vmem:[%s3 + $0x1e0] sm:$0xff]
      %v369 = vld [vmem:[%s3 + $0x1e8] sm:$0xff]
      %v370 = vld [vmem:[%s3 + $0x1f0] sm:$0xff]
      %v371 = vld [vmem:[%s3 + $0x1f8] sm:$0xff]
      %372 = vmatpush.msra.mxu0 %v370
      %373 = vmatpush.msra.mxu0 %v368
      %374 = vmatpush.msra.mxu0 %v366
      %375 = vmatpush.msra.mxu0 %v364
      %376 = vmatpush.msra.mxu0 %v362
      %377 = vmatpush.msra.mxu0 %v360
      %378 = vmatpush.msra.mxu0 %v358
      %379 = vmatpush.msra.mxu0 %v356
      %380 = vmatpush.msra.mxu0 %v354
      %381 = vmatpush.msra.mxu0 %v352
      %382 = vmatpush.msra.mxu0 %v350
      %383 = vmatpush.msra.mxu0 %v348
      %384 = vmatpush.msra.mxu0 %v346
      %385 = vmatpush.msra.mxu0 %v344
      %386 = vmatpush.msra.mxu0 %v342
      %387 = vmatpush.msra.mxu0 %v340
      %388 = vmatmul.f32.gmra.mxu0 %v306
      %v389 = vpop.f32.mrf.mxu0
      %v390 = vadd.f32 0.0, %v389
      %391 = vdwg.mxu0
      %392 = vmatpush.msra.mxu0 %v371
      %393 = vmatpush.msra.mxu0 %v369
      %394 = vmatpush.msra.mxu0 %v367
      %395 = vmatpush.msra.mxu0 %v365
      %396 = vmatpush.msra.mxu0 %v363
      %397 = vmatpush.msra.mxu0 %v361
      %398 = vmatpush.msra.mxu0 %v359
      %399 = vmatpush.msra.mxu0 %v357
      %400 = vmatpush.msra.mxu0 %v355
      %401 = vmatpush.msra.mxu0 %v353
      %402 = vmatpush.msra.mxu0 %v351
      %403 = vmatpush.msra.mxu0 %v349
      %404 = vmatpush.msra.mxu0 %v347
      %405 = vmatpush.msra.mxu0 %v345
      %406 = vmatpush.msra.mxu0 %v343
      %407 = vmatpush.msra.mxu0 %v341
      %408 = vmatmul.f32.gmra.mxu0 %v306
      %v409 = vpop.f32.mrf.mxu0
      %v410 = vadd.f32 0.0, %v409
      %411 = vdwg.mxu0
      %412 = vmatpush.msra.mxu0 %v338
      %413 = vmatpush.msra.mxu0 %v336
      %414 = vmatpush.msra.mxu0 %v334
      %415 = vmatpush.msra.mxu0 %v332
      %416 = vmatpush.msra.mxu0 %v330
      %417 = vmatpush.msra.mxu0 %v328
      %418 = vmatpush.msra.mxu0 %v326
      %419 = vmatpush.msra.mxu0 %v324
      %420 = vmatpush.msra.mxu0 %v322
      %421 = vmatpush.msra.mxu0 %v320
      %422 = vmatpush.msra.mxu0 %v318
      %423 = vmatpush.msra.mxu0 %v316
      %424 = vmatpush.msra.mxu0 %v314
      %425 = vmatpush.msra.mxu0 %v312
      %426 = vmatpush.msra.mxu0 %v310
      %427 = vmatpush.msra.mxu0 %v308
      %428 = vmatmul.f32.gmra.mxu0 %v305
      %v429 = vpop.f32.mrf.mxu0
      %v430 = vadd.f32 %v390, %v429
      %431 = vdwg.mxu0
      %432 = vmatpush.msra.mxu0 %v339
      %433 = vmatpush.msra.mxu0 %v337
      %434 = vmatpush.msra.mxu0 %v335
      %435 = vmatpush.msra.mxu0 %v333
      %436 = vmatpush.msra.mxu0 %v331
      %437 = vmatpush.msra.mxu0 %v329
      %438 = vmatpush.msra.mxu0 %v327
      %439 = vmatpush.msra.mxu0 %v325
      %440 = vmatpush.msra.mxu0 %v323
      %441 = vmatpush.msra.mxu0 %v321
      %442 = vmatpush.msra.mxu0 %v319
      %443 = vmatpush.msra.mxu0 %v317
      %444 = vmatpush.msra.mxu0 %v315
      %445 = vmatpush.msra.mxu0 %v313
      %446 = vmatpush.msra.mxu0 %v311
      %447 = vmatpush.msra.mxu0 %v309
      %448 = vmatmul.f32.gmra.mxu0 %v305
      %v449 = vpop.f32.mrf.mxu0
      %v450 = vadd.f32 %v410, %v449
      %451 = vdwg.mxu0
      %v452 = vld [vmem:[%s3 + $0x200] sm:$0xff]
      %v453 = vld [vmem:[%s3 + $0x208] sm:$0xff]
      %v454 = vld [vmem:[%s3 + $0x210] sm:$0xff]
      %v455 = vld [vmem:[%s3 + $0x218] sm:$0xff]
      %v456 = vld [vmem:[%s3 + $0x220] sm:$0xff]
      %v457 = vld [vmem:[%s3 + $0x228] sm:$0xff]
      %v458 = vld [vmem:[%s3 + $0x230] sm:$0xff]
      %v459 = vld [vmem:[%s3 + $0x238] sm:$0xff]
      %v460 = vld [vmem:[%s3 + $0x240] sm:$0xff]
      %v461 = vld [vmem:[%s3 + $0x248] sm:$0xff]
      %v462 = vld [vmem:[%s3 + $0x250] sm:$0xff]
      %v463 = vld [vmem:[%s3 + $0x258] sm:$0xff]
      %v464 = vld [vmem:[%s3 + $0x260] sm:$0xff]
      %v465 = vld [vmem:[%s3 + $0x268] sm:$0xff]
      %v466 = vld [vmem:[%s3 + $0x270] sm:$0xff]
      %v467 = vld [vmem:[%s3 + $0x278] sm:$0xff]
      %v468 = vld [vmem:[%s3 + $0x280] sm:$0xff]
      %v469 = vld [vmem:[%s3 + $0x288] sm:$0xff]
      %v470 = vld [vmem:[%s3 + $0x290] sm:$0xff]
      %v471 = vld [vmem:[%s3 + $0x298] sm:$0xff]
      %v472 = vld [vmem:[%s3 + $0x2a0] sm:$0xff]
      %v473 = vld [vmem:[%s3 + $0x2a8] sm:$0xff]
      %v474 = vld [vmem:[%s3 + $0x2b0] sm:$0xff]
      %v475 = vld [vmem:[%s3 + $0x2b8] sm:$0xff]
      %v476 = vld [vmem:[%s3 + $0x2c0] sm:$0xff]
      %v477 = vld [vmem:[%s3 + $0x2c8] sm:$0xff]
      %v478 = vld [vmem:[%s3 + $0x2d0] sm:$0xff]
      %v479 = vld [vmem:[%s3 + $0x2d8] sm:$0xff]
      %v480 = vld [vmem:[%s3 + $0x2e0] sm:$0xff]
      %v481 = vld [vmem:[%s3 + $0x2e8] sm:$0xff]
      %v482 = vld [vmem:[%s3 + $0x2f0] sm:$0xff]
      %v483 = vld [vmem:[%s3 + $0x2f8] sm:$0xff]
      %484 = vmatpush.msra.mxu0 %v482
      %485 = vmatpush.msra.mxu0 %v480
      %486 = vmatpush.msra.mxu0 %v478
      %487 = vmatpush.msra.mxu0 %v476
      %488 = vmatpush.msra.mxu0 %v474
      %489 = vmatpush.msra.mxu0 %v472
      %490 = vmatpush.msra.mxu0 %v470
      %491 = vmatpush.msra.mxu0 %v468
      %492 = vmatpush.msra.mxu0 %v466
      %493 = vmatpush.msra.mxu0 %v464
      %494 = vmatpush.msra.mxu0 %v462
      %495 = vmatpush.msra.mxu0 %v460
      %496 = vmatpush.msra.mxu0 %v458
      %497 = vmatpush.msra.mxu0 %v456
      %498 = vmatpush.msra.mxu0 %v454
      %499 = vmatpush.msra.mxu0 %v452
      %500 = vmatmul.f32.gmra.mxu0 %v307
      %v501 = vpop.f32.mrf.mxu0
      %v502 = vadd.f32 0.0, %v501
      %503 = vdwg.mxu0
      %504 = vmatpush.msra.mxu0 %v483
      %505 = vmatpush.msra.mxu0 %v481
      %506 = vmatpush.msra.mxu0 %v479
      %507 = vmatpush.msra.mxu0 %v477
      %508 = vmatpush.msra.mxu0 %v475
      %509 = vmatpush.msra.mxu0 %v473
      %510 = vmatpush.msra.mxu0 %v471
      %511 = vmatpush.msra.mxu0 %v469
      %512 = vmatpush.msra.mxu0 %v467
      %513 = vmatpush.msra.mxu0 %v465
      %514 = vmatpush.msra.mxu0 %v463
      %515 = vmatpush.msra.mxu0 %v461
      %516 = vmatpush.msra.mxu0 %v459
      %517 = vmatpush.msra.mxu0 %v457
      %518 = vmatpush.msra.mxu0 %v455
      %519 = vmatpush.msra.mxu0 %v453
      %520 = vmatmul.f32.gmra.mxu0 %v307
      %v521 = vpop.f32.mrf.mxu0
      %v522 = vadd.f32 0.0, %v521
      %523 = vdwg.mxu0
      %v524 = vadd.f32 %v430, %v502
      %v525 = vadd.f32 %v450, %v522
      %v526 = vld [vmem:[%s4] sm:$0x3]
      %v528 = vperm.slane %v526, 0
      %v529 = vperm.slane %v526, 1
      %v532 = vadd.f32 %v524, %v528
      %v533 = vadd.f32 %v525, %v529
      %v534 = vld [vmem:[%s5] sm:$0xff]
      %v535 = vld [vmem:[%s5 + $0x8] sm:$0xff]
      %v536 = vld [vmem:[%s5 + $0x10] sm:$0xff]
      %v537 = vld [vmem:[%s5 + $0x18] sm:$0xff]
      %v538 = vld [vmem:[%s5 + $0x20] sm:$0xff]
      %v539 = vld [vmem:[%s5 + $0x28] sm:$0xff]
      %v540 = vld [vmem:[%s5 + $0x30] sm:$0xff]
      %v541 = vld [vmem:[%s5 + $0x38] sm:$0xff]
      %v542 = vld [vmem:[%s5 + $0x40] sm:$0xff]
      %v543 = vld [vmem:[%s5 + $0x48] sm:$0xff]
      %v544 = vld [vmem:[%s5 + $0x50] sm:$0xff]
      %v545 = vld [vmem:[%s5 + $0x58] sm:$0xff]
      %v546 = vld [vmem:[%s5 + $0x60] sm:$0xff]
      %v547 = vld [vmem:[%s5 + $0x68] sm:$0xff]
      %v548 = vld [vmem:[%s5 + $0x70] sm:$0xff]
      %v549 = vld [vmem:[%s5 + $0x78] sm:$0xff]
      %v550 = vld [vmem:[%s5 + $0x80] sm:$0xff]
      %v551 = vld [vmem:[%s5 + $0x88] sm:$0xff]
      %v552 = vld [vmem:[%s5 + $0x90] sm:$0xff]
      %v553 = vld [vmem:[%s5 + $0x98] sm:$0xff]
      %v554 = vld [vmem:[%s5 + $0xa0] sm:$0xff]
      %v555 = vld [vmem:[%s5 + $0xa8] sm:$0xff]
      %v556 = vld [vmem:[%s5 + $0xb0] sm:$0xff]
      %v557 = vld [vmem:[%s5 + $0xb8] sm:$0xff]
      %v558 = vld [vmem:[%s5 + $0xc0] sm:$0xff]
      %v559 = vld [vmem:[%s5 + $0xc8] sm:$0xff]
      %v560 = vld [vmem:[%s5 + $0xd0] sm:$0xff]
      %v561 = vld [vmem:[%s5 + $0xd8] sm:$0xff]
      %v562 = vld [vmem:[%s5 + $0xe0] sm:$0xff]
      %v563 = vld [vmem:[%s5 + $0xe8] sm:$0xff]
      %v564 = vld [vmem:[%s5 + $0xf0] sm:$0xff]
      %v565 = vld [vmem:[%s5 + $0xf8] sm:$0xff]
      %v566 = vld [vmem:[%s6] sm:$0x1]
      %v568 = vperm.slane %v566, 0
      %570 = vmatpush.msra.mxu0 %v549
      %571 = vmatpush.msra.mxu0 %v548
      %572 = vmatpush.msra.mxu0 %v547
      %573 = vmatpush.msra.mxu0 %v546
      %574 = vmatpush.msra.mxu0 %v545
      %575 = vmatpush.msra.mxu0 %v544
      %576 = vmatpush.msra.mxu0 %v543
      %577 = vmatpush.msra.mxu0 %v542
      %578 = vmatpush.msra.mxu0 %v541
      %579 = vmatpush.msra.mxu0 %v540
      %580 = vmatpush.msra.mxu0 %v539
      %581 = vmatpush.msra.mxu0 %v538
      %582 = vmatpush.msra.mxu0 %v537
      %583 = vmatpush.msra.mxu0 %v536
      %584 = vmatpush.msra.mxu0 %v535
      %585 = vmatpush.msra.mxu0 %v534
      %586 = vmatmul.f32.gmra.mxu0 %v532
      %v587 = vpop.f32.mrf.mxu0
      %v588 = vadd.f32 %v568, %v587
      %589 = vdwg.mxu0
      %590 = vmatpush.msra.mxu0 %v565
      %591 = vmatpush.msra.mxu0 %v564
      %592 = vmatpush.msra.mxu0 %v563
      %593 = vmatpush.msra.mxu0 %v562
      %594 = vmatpush.msra.mxu0 %v561
      %595 = vmatpush.msra.mxu0 %v560
      %596 = vmatpush.msra.mxu0 %v559
      %597 = vmatpush.msra.mxu0 %v558
      %598 = vmatpush.msra.mxu0 %v557
      %599 = vmatpush.msra.mxu0 %v556
      %600 = vmatpush.msra.mxu0 %v555
      %601 = vmatpush.msra.mxu0 %v554
      %602 = vmatpush.msra.mxu0 %v553
      %603 = vmatpush.msra.mxu0 %v552
      %604 = vmatpush.msra.mxu0 %v551
      %605 = vmatpush.msra.mxu0 %v550
      %606 = vmatmul.f32.gmra.mxu0 %v533
      %v607 = vpop.f32.mrf.mxu0
      %v608 = vadd.f32 %v588, %v607
      %609 = vdwg.mxu0
      %610 = vmax.xlane.f32.xlu0 %v608
      %v611 = vpop.xlane.xlu0 %610
      %v612 = vsub.f32 %v608, %v611
      %v613 = vmul.f32 %v612, 1.442695
      %v614 = vpow.pop %v613
      %615 = vadd.xlane.f32.xlu0 %v614
      %v616 = vpop.xlane.xlu0 %615
      %v617 = vlog2.pop %v616
      %v618 = vmul.f32 %v617, 0.6931472
      %v619 = vsub.f32 %v612, %v618
      %620 = vst [vmem:[%s298] sm:$0xff] %v619
      %621 = vst [vmem:[#allocation2] sm:$0xff] %v532
      %622 = vst [vmem:[%s8] sm:$0xff] %v532
      %p623 = scmp.lt.s32.totalorder %s20, 7
      %s624 = scalar_select %p623, %s20, 7
      %s625 = smul.addr %s624, 8
      %s626 = scalar_lea.vmem %s7, %s625
      // Predicated region
      $region53: #{rnn_forward.1} parent=47 // pred_check
        %p627 = pneg %p190
      $region54: #{rnn_forward.1} parent=47 // pred_check_branch
        %629 = sbr.rel (%p627) target = $region56
      $region55: #{rnn_forward.1} parent=47 // pred_region
        _
      $region56: #{rnn_forward.1} parent=47 // pred_fallthru
        _
      // Predicated region
      $region57: #{rnn_forward.1} parent=47 // pred_check
        %p630 = pneg %p211
      $region58: #{rnn_forward.1} parent=47 // pred_check_branch
        %632 = sbr.rel (%p630) target = $region60
      $region59: #{rnn_forward.1} parent=47 // pred_region
        _
      $region60: #{rnn_forward.1} parent=47 // pred_fallthru
        _
      // Predicated region
      $region61: #{rnn_forward.1} parent=47 // pred_check
        %p633 = pneg %p211
      $region62: #{rnn_forward.1} parent=47 // pred_check_branch
        %635 = sbr.rel (%p633) target = $region64
      $region63: #{rnn_forward.1} parent=47 // pred_region
        _
      $region64: #{rnn_forward.1} parent=47 // pred_fallthru
        _
    $region48: #{rnn_forward.1} parent=5 // pred_fallthru
      _
    %p636 = scmp.le.s32.totalorder 2, %s15
    // Predicated region
    $region65: #{rnn_forward.1} parent=5 // pred_check
      %p637 = pneg %p636
    $region66: #{rnn_forward.1} parent=5 // pred_check_branch
      %639 = sbr.rel (%p637) target = $region68
    $region67: #{rnn_forward.1} parent=5 // pred_region
      %s640 = ssub.s32 %s15, 2
      // Predicated region
      $region69: #{rnn_forward.1} parent=67 // pred_check
        %p641 = pneg %p196
      $region70: #{rnn_forward.1} parent=67 // pred_check_branch
        %643 = sbr.rel (%p641) target = $region72
      $region71: #{rnn_forward.1} parent=67 // pred_region
        %p644 = scmp.lt.s32.totalorder %s21, 7
        %s645 = scalar_select %p644, %s21, 7
        %s646 = smul.addr %s645, 8
        %s647 = scalar_lea.vmem %s7, %s646
      $region72: #{rnn_forward.1} parent=67 // pred_fallthru
        _
    $region68: #{rnn_forward.1} parent=5 // pred_fallthru
      _
  $region6: #{rnn_forward.1} parent=0 // loop_footer
    %s19 = sadd.s32 1, %s15
  $region7: #{rnn_forward.1} parent=0 // loop_footer_branch
    %14 = sbr.rel target = $region3
  $region8: #{rnn_forward.1} parent=0 // loop_exit
    _

</llo_original>
